<compile_context>
chip_gen: v7x
topology: tpu7x:2x2x1
jax: 0.10.0
libtpu: 0.0.40
codegen_flags: <defaults>
</compile_context>

<pallas_src>
import jax
import jax.numpy as jnp
from jax.experimental import pallas as pl
from jax.experimental.pallas import tpu as pltpu


def _mclr_kernel(x_ref, w_ref, b_ref, o_ref):
    # x_ref : (tm, D)      bf16 flattened inputs (unpadded feature dim)
    # w_ref : (D, N_pad)   bf16 transposed, N-padded weights
    # b_ref : (1, N_pad)   f32 padded bias
    # o_ref : (tm, N_pad)  f32 logits
    logits = jnp.dot(x_ref[...], w_ref[...],
                     preferred_element_type=jnp.float32)
    o_ref[...] = logits + b_ref[...]


def _ceil_to(v, m):
    return ((v + m - 1) // m) * m


@jax.jit
def mclr_forward(x, weight, bias):
    """Forward of Mclr_CrossEntropy: flatten(x, 1) @ weight.T + bias."""
    B = x.shape[0]
    # torch.flatten(x, 1); bf16 stream for the memory-bound matmul operand.
    x2 = x.reshape(B, -1).astype(jnp.bfloat16)
    D = x2.shape[1]
    Nout = weight.shape[0]

    # Pad only the tiny weight/bias: output dim -> 128 for a lane-dense,
    # unmasked output store.  Padded columns are zero, so results are exact
    # for the real columns and simply sliced off at the end.
    N_pad = max(128, _ceil_to(Nout, 128))
    w_p = jnp.pad(weight.T.astype(jnp.bfloat16), ((0, 0), (0, N_pad - Nout)))
    b_p = jnp.pad(bias.astype(jnp.float32), (0, N_pad - Nout)).reshape(1, N_pad)

    # Batch tiling:
    #   * B <= 128  -> single fused block (tm == B, full-dim exemption, no pad).
    #   * otherwise -> at least 2 tiles on a "parallel" axis (feeds both v7x
    #     TensorCores), capped at 1024 rows/tile.  Partial edge blocks are
    #     handled by Pallas (OOB rows never affect valid output rows since the
    #     matmul is row-wise independent).
    if B <= 128:
        tm = B
    else:
        tm = min(1024, _ceil_to(-(-B // 2), 8))
    grid = -(-B // tm)

    out = pl.pallas_call(
        _mclr_kernel,
        out_shape=jax.ShapeDtypeStruct((B, N_pad), jnp.float32),
        grid_spec=pltpu.PrefetchScalarGridSpec(
            num_scalar_prefetch=0,
            grid=(grid,),
            in_specs=[
                pl.BlockSpec((tm, D), lambda i: (i, 0)),
                pl.BlockSpec((D, N_pad), lambda i: (0, 0)),
                pl.BlockSpec((1, N_pad), lambda i: (0, 0)),
            ],
            out_specs=pl.BlockSpec((tm, N_pad), lambda i: (i, 0)),
        ),
        compiler_params=pltpu.CompilerParams(
            dimension_semantics=("parallel",)),
    )(x2, w_p, b_p)

    return out[:, :Nout]


def _reference(x, weight, bias):
    B = x.shape[0]
    return x.reshape(B, -1) @ weight.T + bias[None, :]


if __name__ == "__main__":
    # Module defaults: input_dim=784 (1x28x28 MNIST-style images), output_dim=10.
    B, C, H, W = 8, 1, 28, 28
    input_dim = C * H * W          # 784
    output_dim = 10

    key = jax.random.PRNGKey(0)
    kx, kw, kb = jax.random.split(key, 3)

    x = jax.random.normal(kx, (B, C, H, W), dtype=jnp.float32)
    weight = jax.random.normal(kw, (output_dim, input_dim),
                               dtype=jnp.float32) * 0.05
    bias = jax.random.normal(kb, (output_dim,), dtype=jnp.float32) * 0.1

    out = mclr_forward(x, weight, bias)
    out = jax.block_until_ready(out)

    ref = _reference(x, weight, bias)
    assert out.shape == (B, output_dim), out.shape
    # bf16 streaming of x/weight with f32 accumulation: logits match the f32
    # reference to ~1e-2 relative.
    assert jnp.allclose(out, ref, rtol=3e-2, atol=3e-2), \
        float(jnp.max(jnp.abs(out - ref)))

    print("KERNEL_OK")
</pallas_src>

<mosaic_0001>
module attributes {stable_mosaic.version = 11 : i64} {
  func.func @_mclr_kernel(%arg0: i32, %arg1: memref<8x784xbf16, #tpu.memory_space<vmem>>, %arg2: memref<784x128xbf16, #tpu.memory_space<vmem>>, %arg3: memref<1x128xf32, #tpu.memory_space<vmem>>, %arg4: memref<8x128xf32, #tpu.memory_space<vmem>>) attributes {dimension_semantics = [#tpu.dimension_semantics<parallel>], iteration_bounds = array<i64: 1>, scalar_prefetch = 0 : i64, scratch_operands = 0 : i64, tpu.core_type = #tpu.core_type<tc>, window_params = [{transform_indices = @transform_0, window_bounds = array<i64: 8, 784>}, {pipeline_mode = #tpu.pipeline_mode<synchronous>, transform_indices = @transform_1, window_bounds = array<i64: 784, 128>}, {pipeline_mode = #tpu.pipeline_mode<synchronous>, transform_indices = @transform_2, window_bounds = array<i64: 1, 128>}, {transform_indices = @transform_3, window_bounds = array<i64: 8, 128>}]} {
    %c0 = arith.constant 0 : index
    %c0_0 = arith.constant 0 : index
    %0 = vector.load %arg1[%c0, %c0_0] : memref<8x784xbf16, #tpu.memory_space<vmem>>, vector<8x784xbf16>
    %c0_1 = arith.constant 0 : index
    %c0_2 = arith.constant 0 : index
    %1 = vector.load %arg2[%c0_1, %c0_2] : memref<784x128xbf16, #tpu.memory_space<vmem>>, vector<784x128xbf16>
    %cst = arith.constant dense<0.000000e+00> : vector<8x128xf32>
    %2 = tpu.matmul %0, %1, %cst {dimension_numbers = #tpu.dot_dimension_numbers<[1], [0], [0], [1], [0, 0, 1, 1], [], []>} : vector<8x784xbf16>, vector<784x128xbf16>, vector<8x128xf32> -> vector<8x128xf32>
    %c0_3 = arith.constant 0 : index
    %c0_4 = arith.constant 0 : index
    %3 = vector.load %arg3[%c0_3, %c0_4] : memref<1x128xf32, #tpu.memory_space<vmem>>, vector<1x128xf32>
    %4 = vector.broadcast %3 : vector<1x128xf32> to vector<8x128xf32>
    %5 = arith.addf %2, %4 : vector<8x128xf32>
    %c0_5 = arith.constant 0 : index
    %c0_6 = arith.constant 0 : index
    %6 = vector.load %arg4[%c0_5, %c0_6] : memref<8x128xf32, #tpu.memory_space<vmem>>, vector<8x128xf32>
    tpu.vector_store %arg4[%c0_5, %c0_6], %5 {strides = array<i32>} : memref<8x128xf32, #tpu.memory_space<vmem>>, vector<8x128xf32>,
    return
  }
  func.func @transform_0(%arg0: i32) -> (i32, i32) {
    %c0_i32 = arith.constant 0 : i32
    %c0_i32_0 = arith.constant 0 : i32
    return %arg0, %c0_i32 : i32, i32
  }
  func.func @transform_1(%arg0: i32) -> (i32, i32) {
    %c0_i32 = arith.constant 0 : i32
    %c0_i32_0 = arith.constant 0 : i32
    %c0_i32_1 = arith.constant 0 : i32
    return %c0_i32, %c0_i32_0 : i32, i32
  }
  func.func @transform_2(%arg0: i32) -> (i32, i32) {
    %c0_i32 = arith.constant 0 : i32
    %c0_i32_0 = arith.constant 0 : i32
    %c0_i32_1 = arith.constant 0 : i32
    return %c0_i32, %c0_i32_0 : i32, i32
  }
  func.func @transform_3(%arg0: i32) -> (i32, i32) {
    %c0_i32 = arith.constant 0 : i32
    %c0_i32_0 = arith.constant 0 : i32
    return %arg0, %c0_i32 : i32, i32
  }
}

</mosaic_0001>

<llo_original>
// kernel: mclr_forward.1
$region0: #{mclr_forward.1}
  #allocation0 [shape = 'u32[]', space=smem, size = 0x4, offset = 0x4, fixed_abs, tag = 'smem constant byte address 0x4 - core index']
  #allocation1 [shape = 'u32[144,128]{1,0:T(1,128)}', space=vmem, size = 0x12000, scoped, tag = 'internal scratch']
  %s0 = inlined_call_operand.vmem [shape: bf16[8,784], index: 0, kind: input, shape index: {}]
  %s1 = inlined_call_operand.vmem [shape: bf16[784,128], index: 1, kind: input, shape index: {}]
  %s2 = inlined_call_operand.vmem [shape: f32[1,128], index: 2, kind: input, shape index: {}]
  %s3 = inlined_call_operand.hbm [shape: f32[8,128], index: 3, kind: output, shape index: {}]
  %s4 = sld [smem:[#allocation0]]
  $region22: #{mclr_forward.1} parent=0
    _
  %s6 = ssub.s32 1, %s4
  %s7 = scalar_select 0, %s6, %s4
  $region1: #{mclr_forward.1} parent=0
    #allocation2 [shape = 'u8[4096]{0}', space=vmem, size = 0x1000, scoped, tag = 'output window, operand 0, single buffered']
    #allocation3 [shape = 's32[1]{0}', space=sflag, size = 0x4, scoped, tag = 'scoped memory for mclr_forward.1']
    %8 = vsyncpa [#allocation3], 0
    // Predicated region
    $region2: #{mclr_forward.1} parent=1 // pred_check
      _
    $region3: #{mclr_forward.1} parent=1 // pred_check_branch
      %10 = sbr.rel (0) target = $region5
    $region4: #{mclr_forward.1} parent=1 // pred_region
      _
    $region5: #{mclr_forward.1} parent=1 // pred_fallthru
      _
    // Predicated region
    $region6: #{mclr_forward.1} parent=1 // pred_check
      _
    $region7: #{mclr_forward.1} parent=1 // pred_check_branch
      %12 = sbr.rel (0) target = $region9
    $region8: #{mclr_forward.1} parent=1 // pred_region
      _
    $region9: #{mclr_forward.1} parent=1 // pred_fallthru
      _
    // Predicated region
    $region10: #{mclr_forward.1} parent=1 // pred_check
      _
    $region11: #{mclr_forward.1} parent=1 // pred_check_branch
      %14 = sbr.rel (0) target = $region13
    $region12: #{mclr_forward.1} parent=1 // pred_region
      _
    $region13: #{mclr_forward.1} parent=1 // pred_fallthru
      _
    %v16 = vld [vmem:[%s0] sm:$0xff]
    %v17 = vld [vmem:[%s0 + $0x8] sm:$0xff]
    %v18 = vld [vmem:[%s0 + $0x10] sm:$0xff]
    %v19 = vld [vmem:[%s0 + $0x18] sm:$0xf]
    %v20 = vld [vmem:[%s1] sm:$0xf]
    %v21 = vld [vmem:[%s1 + $0x4] sm:$0xf]
    %v22 = vld [vmem:[%s1 + $0x8] sm:$0xf]
    %v23 = vld [vmem:[%s1 + $0xc] sm:$0xf]
    %v24 = vld [vmem:[%s1 + $0x10] sm:$0xf]
    %v25 = vld [vmem:[%s1 + $0x14] sm:$0xf]
    %v26 = vld [vmem:[%s1 + $0x18] sm:$0xf]
    %v27 = vld [vmem:[%s1 + $0x1c] sm:$0xf]
    %v28 = vld [vmem:[%s1 + $0x20] sm:$0xf]
    %v29 = vld [vmem:[%s1 + $0x24] sm:$0xf]
    %v30 = vld [vmem:[%s1 + $0x28] sm:$0xf]
    %v31 = vld [vmem:[%s1 + $0x2c] sm:$0xf]
    %v32 = vld [vmem:[%s1 + $0x30] sm:$0xf]
    %v33 = vld [vmem:[%s1 + $0x34] sm:$0xf]
    %v34 = vld [vmem:[%s1 + $0x38] sm:$0xf]
    %v35 = vld [vmem:[%s1 + $0x3c] sm:$0xf]
    %v36 = vld [vmem:[%s1 + $0x40] sm:$0xf]
    %v37 = vld [vmem:[%s1 + $0x44] sm:$0xf]
    %v38 = vld [vmem:[%s1 + $0x48] sm:$0xf]
    %v39 = vld [vmem:[%s1 + $0x4c] sm:$0xf]
    %v40 = vld [vmem:[%s1 + $0x50] sm:$0xf]
    %v41 = vld [vmem:[%s1 + $0x54] sm:$0xf]
    %v42 = vld [vmem:[%s1 + $0x58] sm:$0xf]
    %v43 = vld [vmem:[%s1 + $0x5c] sm:$0xf]
    %v44 = vld [vmem:[%s1 + $0x60] sm:$0xf]
    %v45 = vld [vmem:[%s1 + $0x64] sm:$0xf]
    %v46 = vld [vmem:[%s1 + $0x68] sm:$0xf]
    %v47 = vld [vmem:[%s1 + $0x6c] sm:$0xf]
    %v48 = vld [vmem:[%s1 + $0x70] sm:$0xf]
    %v49 = vld [vmem:[%s1 + $0x74] sm:$0xf]
    %v50 = vld [vmem:[%s1 + $0x78] sm:$0xf]
    %v51 = vld [vmem:[%s1 + $0x7c] sm:$0xf]
    %v52 = vld [vmem:[%s1 + $0x80] sm:$0xf]
    %v53 = vld [vmem:[%s1 + $0x84] sm:$0xf]
    %v54 = vld [vmem:[%s1 + $0x88] sm:$0xf]
    %v55 = vld [vmem:[%s1 + $0x8c] sm:$0xf]
    %v56 = vld [vmem:[%s1 + $0x90] sm:$0xf]
    %v57 = vld [vmem:[%s1 + $0x94] sm:$0xf]
    %v58 = vld [vmem:[%s1 + $0x98] sm:$0xf]
    %v59 = vld [vmem:[%s1 + $0x9c] sm:$0xf]
    %v60 = vld [vmem:[%s1 + $0xa0] sm:$0xf]
    %v61 = vld [vmem:[%s1 + $0xa4] sm:$0xf]
    %v62 = vld [vmem:[%s1 + $0xa8] sm:$0xf]
    %v63 = vld [vmem:[%s1 + $0xac] sm:$0xf]
    %v64 = vld [vmem:[%s1 + $0xb0] sm:$0xf]
    %v65 = vld [vmem:[%s1 + $0xb4] sm:$0xf]
    %v66 = vld [vmem:[%s1 + $0xb8] sm:$0xf]
    %v67 = vld [vmem:[%s1 + $0xbc] sm:$0xf]
    %v68 = vld [vmem:[%s1 + $0xc0] sm:$0xf]
    %v69 = vld [vmem:[%s1 + $0xc4] sm:$0xf]
    %v70 = vld [vmem:[%s1 + $0xc8] sm:$0xf]
    %v71 = vld [vmem:[%s1 + $0xcc] sm:$0xf]
    %v72 = vld [vmem:[%s1 + $0xd0] sm:$0xf]
    %v73 = vld [vmem:[%s1 + $0xd4] sm:$0xf]
    %v74 = vld [vmem:[%s1 + $0xd8] sm:$0xf]
    %v75 = vld [vmem:[%s1 + $0xdc] sm:$0xf]
    %v76 = vld [vmem:[%s1 + $0xe0] sm:$0xf]
    %v77 = vld [vmem:[%s1 + $0xe4] sm:$0xf]
    %v78 = vld [vmem:[%s1 + $0xe8] sm:$0xf]
    %v79 = vld [vmem:[%s1 + $0xec] sm:$0xf]
    %v80 = vld [vmem:[%s1 + $0xf0] sm:$0xf]
    %v81 = vld [vmem:[%s1 + $0xf4] sm:$0xf]
    %v82 = vld [vmem:[%s1 + $0xf8] sm:$0xf]
    %v83 = vld [vmem:[%s1 + $0xfc] sm:$0xf]
    %v84 = vld [vmem:[%s1 + $0x100] sm:$0xf]
    %v85 = vld [vmem:[%s1 + $0x104] sm:$0xf]
    %v86 = vld [vmem:[%s1 + $0x108] sm:$0xf]
    %v87 = vld [vmem:[%s1 + $0x10c] sm:$0xf]
    %v88 = vld [vmem:[%s1 + $0x110] sm:$0xf]
    %v89 = vld [vmem:[%s1 + $0x114] sm:$0xf]
    %v90 = vld [vmem:[%s1 + $0x118] sm:$0xf]
    %v91 = vld [vmem:[%s1 + $0x11c] sm:$0xf]
    %v92 = vld [vmem:[%s1 + $0x120] sm:$0xf]
    %v93 = vld [vmem:[%s1 + $0x124] sm:$0xf]
    %v94 = vld [vmem:[%s1 + $0x128] sm:$0xf]
    %v95 = vld [vmem:[%s1 + $0x12c] sm:$0xf]
    %v96 = vld [vmem:[%s1 + $0x130] sm:$0xf]
    %v97 = vld [vmem:[%s1 + $0x134] sm:$0xf]
    %v98 = vld [vmem:[%s1 + $0x138] sm:$0xf]
    %v99 = vld [vmem:[%s1 + $0x13c] sm:$0xf]
    %v100 = vld [vmem:[%s1 + $0x140] sm:$0xf]
    %v101 = vld [vmem:[%s1 + $0x144] sm:$0xf]
    %v102 = vld [vmem:[%s1 + $0x148] sm:$0xf]
    %v103 = vld [vmem:[%s1 + $0x14c] sm:$0xf]
    %v104 = vld [vmem:[%s1 + $0x150] sm:$0xf]
    %v105 = vld [vmem:[%s1 + $0x154] sm:$0xf]
    %v106 = vld [vmem:[%s1 + $0x158] sm:$0xf]
    %v107 = vld [vmem:[%s1 + $0x15c] sm:$0xf]
    %v108 = vld [vmem:[%s1 + $0x160] sm:$0xf]
    %v109 = vld [vmem:[%s1 + $0x164] sm:$0xf]
    %v110 = vld [vmem:[%s1 + $0x168] sm:$0xf]
    %v111 = vld [vmem:[%s1 + $0x16c] sm:$0xf]
    %v112 = vld [vmem:[%s1 + $0x170] sm:$0xf]
    %v113 = vld [vmem:[%s1 + $0x174] sm:$0xf]
    %v114 = vld [vmem:[%s1 + $0x178] sm:$0xf]
    %v115 = vld [vmem:[%s1 + $0x17c] sm:$0xf]
    %v116 = vld [vmem:[%s1 + $0x180] sm:$0xf]
    %v117 = vld [vmem:[%s1 + $0x184] sm:$0xf]
    %v118 = vld [vmem:[%s2] sm:$0x1]
    %v120 = vlaneseq
    %v121 = vshrl.u32 %v120, 7
    %v122 = vsub.s32 0, %v121
    %v123 = vrot.slane %v118, %v122
    %v129 = vunpack.c.l.b16 %v16
    %v130 = vunpack.c.h.b16 %v16
    %v131 = vunpack.c.l.b16 %v17
    %v132 = vunpack.c.h.b16 %v17
    %v133 = vunpack.c.l.b16 %v18
    %v134 = vunpack.c.h.b16 %v18
    %v135 = vunpack.c.l.b16 %v19
    %v136 = vpack.c.b16 %v129, %v129
    %v137 = vpack.c.b16 %v130, %v130
    %v138 = vpack.c.b16 %v131, %v131
    %v139 = vpack.c.b16 %v132, %v132
    %v140 = vpack.c.b16 %v133, %v133
    %v141 = vpack.c.b16 %v134, %v134
    %v142 = vpack.c.b16 %v135, %v135
    %v247 = vunpack.c.l.b16 %v20
    %v248 = vunpack.c.l.b16 %v21
    %v249 = vunpack.c.l.b16 %v22
    %v250 = vunpack.c.l.b16 %v23
    %v251 = vunpack.c.l.b16 %v24
    %v252 = vunpack.c.l.b16 %v25
    %v253 = vunpack.c.l.b16 %v26
    %v254 = vunpack.c.l.b16 %v27
    %v255 = vunpack.c.l.b16 %v28
    %v256 = vunpack.c.l.b16 %v29
    %v257 = vunpack.c.l.b16 %v30
    %v258 = vunpack.c.l.b16 %v31
    %v259 = vunpack.c.l.b16 %v32
    %v260 = vunpack.c.l.b16 %v33
    %v261 = vunpack.c.l.b16 %v34
    %v262 = vunpack.c.l.b16 %v35
    %v263 = vunpack.c.l.b16 %v36
    %v264 = vunpack.c.l.b16 %v37
    %v265 = vunpack.c.l.b16 %v38
    %v266 = vunpack.c.l.b16 %v39
    %v267 = vunpack.c.l.b16 %v40
    %v268 = vunpack.c.l.b16 %v41
    %v269 = vunpack.c.l.b16 %v42
    %v270 = vunpack.c.l.b16 %v43
    %v271 = vunpack.c.l.b16 %v44
    %v272 = vunpack.c.l.b16 %v45
    %v273 = vunpack.c.l.b16 %v46
    %v274 = vunpack.c.l.b16 %v47
    %v275 = vunpack.c.l.b16 %v48
    %v276 = vunpack.c.l.b16 %v49
    %v277 = vunpack.c.l.b16 %v50
    %v278 = vunpack.c.l.b16 %v51
    %v279 = vunpack.c.l.b16 %v52
    %v280 = vunpack.c.l.b16 %v53
    %v281 = vunpack.c.l.b16 %v54
    %v282 = vunpack.c.l.b16 %v55
    %v283 = vunpack.c.l.b16 %v56
    %v284 = vunpack.c.l.b16 %v57
    %v285 = vunpack.c.l.b16 %v58
    %v286 = vunpack.c.l.b16 %v59
    %v287 = vunpack.c.l.b16 %v60
    %v288 = vunpack.c.l.b16 %v61
    %v289 = vunpack.c.l.b16 %v62
    %v290 = vunpack.c.l.b16 %v63
    %v291 = vunpack.c.l.b16 %v64
    %v292 = vunpack.c.l.b16 %v65
    %v293 = vunpack.c.l.b16 %v66
    %v294 = vunpack.c.l.b16 %v67
    %v295 = vunpack.c.l.b16 %v68
    %v296 = vunpack.c.l.b16 %v69
    %v297 = vunpack.c.l.b16 %v70
    %v298 = vunpack.c.l.b16 %v71
    %v299 = vunpack.c.l.b16 %v72
    %v300 = vunpack.c.l.b16 %v73
    %v301 = vunpack.c.l.b16 %v74
    %v302 = vunpack.c.l.b16 %v75
    %v303 = vunpack.c.l.b16 %v76
    %v304 = vunpack.c.l.b16 %v77
    %v305 = vunpack.c.l.b16 %v78
    %v306 = vunpack.c.l.b16 %v79
    %v307 = vunpack.c.l.b16 %v80
    %v308 = vunpack.c.l.b16 %v81
    %v309 = vunpack.c.l.b16 %v82
    %v310 = vunpack.c.l.b16 %v83
    %v311 = vunpack.c.l.b16 %v84
    %v312 = vunpack.c.l.b16 %v85
    %v313 = vunpack.c.l.b16 %v86
    %v314 = vunpack.c.l.b16 %v87
    %v315 = vunpack.c.l.b16 %v88
    %v316 = vunpack.c.l.b16 %v89
    %v317 = vunpack.c.l.b16 %v90
    %v318 = vunpack.c.l.b16 %v91
    %v319 = vunpack.c.l.b16 %v92
    %v320 = vunpack.c.l.b16 %v93
    %v321 = vunpack.c.l.b16 %v94
    %v322 = vunpack.c.l.b16 %v95
    %v323 = vunpack.c.l.b16 %v96
    %v324 = vunpack.c.l.b16 %v97
    %v325 = vunpack.c.l.b16 %v98
    %v326 = vunpack.c.l.b16 %v99
    %v327 = vunpack.c.l.b16 %v100
    %v328 = vunpack.c.l.b16 %v101
    %v329 = vunpack.c.l.b16 %v102
    %v330 = vunpack.c.l.b16 %v103
    %v331 = vunpack.c.l.b16 %v104
    %v332 = vunpack.c.l.b16 %v105
    %v333 = vunpack.c.l.b16 %v106
    %v334 = vunpack.c.l.b16 %v107
    %v335 = vunpack.c.l.b16 %v108
    %v336 = vunpack.c.l.b16 %v109
    %v337 = vunpack.c.l.b16 %v110
    %v338 = vunpack.c.l.b16 %v111
    %v339 = vunpack.c.l.b16 %v112
    %v340 = vunpack.c.l.b16 %v113
    %v341 = vunpack.c.l.b16 %v114
    %v342 = vunpack.c.l.b16 %v115
    %v343 = vunpack.c.l.b16 %v116
    %v344 = vunpack.c.l.b16 %v117
    %v345 = vpack.c.b16 %v248, %v247
    %v346 = vpack.c.b16 %v250, %v249
    %v347 = vpack.c.b16 %v252, %v251
    %v348 = vpack.c.b16 %v254, %v253
    %v349 = vpack.c.b16 %v256, %v255
    %v350 = vpack.c.b16 %v258, %v257
    %v351 = vpack.c.b16 %v260, %v259
    %v352 = vpack.c.b16 %v262, %v261
    %v353 = vpack.c.b16 %v264, %v263
    %v354 = vpack.c.b16 %v266, %v265
    %v355 = vpack.c.b16 %v268, %v267
    %v356 = vpack.c.b16 %v270, %v269
    %v357 = vpack.c.b16 %v272, %v271
    %v358 = vpack.c.b16 %v274, %v273
    %v359 = vpack.c.b16 %v276, %v275
    %v360 = vpack.c.b16 %v278, %v277
    %v361 = vpack.c.b16 %v280, %v279
    %v362 = vpack.c.b16 %v282, %v281
    %v363 = vpack.c.b16 %v284, %v283
    %v364 = vpack.c.b16 %v286, %v285
    %v365 = vpack.c.b16 %v288, %v287
    %v366 = vpack.c.b16 %v290, %v289
    %v367 = vpack.c.b16 %v292, %v291
    %v368 = vpack.c.b16 %v294, %v293
    %v369 = vpack.c.b16 %v296, %v295
    %v370 = vpack.c.b16 %v298, %v297
    %v371 = vpack.c.b16 %v300, %v299
    %v372 = vpack.c.b16 %v302, %v301
    %v373 = vpack.c.b16 %v304, %v303
    %v374 = vpack.c.b16 %v306, %v305
    %v375 = vpack.c.b16 %v308, %v307
    %v376 = vpack.c.b16 %v310, %v309
    %v377 = vpack.c.b16 %v312, %v311
    %v378 = vpack.c.b16 %v314, %v313
    %v379 = vpack.c.b16 %v316, %v315
    %v380 = vpack.c.b16 %v318, %v317
    %v381 = vpack.c.b16 %v320, %v319
    %v382 = vpack.c.b16 %v322, %v321
    %v383 = vpack.c.b16 %v324, %v323
    %v384 = vpack.c.b16 %v326, %v325
    %v385 = vpack.c.b16 %v328, %v327
    %v386 = vpack.c.b16 %v330, %v329
    %v387 = vpack.c.b16 %v332, %v331
    %v388 = vpack.c.b16 %v334, %v333
    %v389 = vpack.c.b16 %v336, %v335
    %v390 = vpack.c.b16 %v338, %v337
    %v391 = vpack.c.b16 %v340, %v339
    %v392 = vpack.c.b16 %v342, %v341
    %v393 = vpack.c.b16 %v344, %v343
    %vm443 = vcmask 130048
    %v445 = vsel %vm443, %v142, 0
    %447 = vmatprep.subr.bf16.mxu0 0
    %448 = vmatpush1.bf16.msra.mxu0 %v345
    %449 = vmatprep.subr.bf16.mxu0 0
    %450 = vmatpush1.bf16.msra.mxu0 %v346
    %451 = vmatprep.subr.bf16.mxu0 0
    %452 = vmatpush1.bf16.msra.mxu0 %v347
    %453 = vmatprep.subr.bf16.mxu0 0
    %454 = vmatpush1.bf16.msra.mxu0 %v348
    %455 = vmatprep.subr.bf16.mxu0 0
    %456 = vmatpush1.bf16.msra.mxu0 %v349
    %457 = vmatprep.subr.bf16.mxu0 0
    %458 = vmatpush1.bf16.msra.mxu0 %v350
    %459 = vmatprep.subr.bf16.mxu0 0
    %460 = vmatpush1.bf16.msra.mxu0 %v351
    %461 = vmatprep.subr.bf16.mxu0 0
    %462 = vmatpush1.bf16.msra.mxu0 %v352
    %463 = vmatprep.subr.bf16.mxu0 0
    %464 = vmatpush1.bf16.msra.mxu0 %v353
    %465 = vmatprep.subr.bf16.mxu0 0
    %466 = vmatpush1.bf16.msra.mxu0 %v354
    %467 = vmatprep.subr.bf16.mxu0 0
    %468 = vmatpush1.bf16.msra.mxu0 %v355
    %469 = vmatprep.subr.bf16.mxu0 0
    %470 = vmatpush1.bf16.msra.mxu0 %v356
    %471 = vmatprep.subr.bf16.mxu0 0
    %472 = vmatpush1.bf16.msra.mxu0 %v357
    %473 = vmatprep.subr.bf16.mxu0 0
    %474 = vmatpush1.bf16.msra.mxu0 %v358
    %475 = vmatprep.subr.bf16.mxu0 0
    %476 = vmatpush1.bf16.msra.mxu0 %v359
    %477 = vmatprep.subr.bf16.mxu0 0
    %478 = vmatpush1.bf16.msra.mxu0 %v360
    %479 = vmatprep.mubr.bf16.mxu0 %v137
    %480 = vmatmul.mubr.bf16.gmra.mrb[0].mxu0 %v136
    %v481 = vpop.f32.mrb[0].mxu0
    %v482 = vadd.f32 %v123, %v481
    %v483 = vpop.f32.mrb[0].mxu0
    %v484 = vpop.f32.mrb[0].mxu0
    %v485 = vpop.f32.mrb[0].mxu0
    %486 = vdwg.mxu0
    %487 = vmatprep.subr.bf16.mxu0 0
    %488 = vmatpush1.bf16.msra.mxu0 %v361
    %489 = vmatprep.subr.bf16.mxu0 0
    %490 = vmatpush1.bf16.msra.mxu0 %v362
    %491 = vmatprep.subr.bf16.mxu0 0
    %492 = vmatpush1.bf16.msra.mxu0 %v363
    %493 = vmatprep.subr.bf16.mxu0 0
    %494 = vmatpush1.bf16.msra.mxu0 %v364
    %495 = vmatprep.subr.bf16.mxu0 0
    %496 = vmatpush1.bf16.msra.mxu0 %v365
    %497 = vmatprep.subr.bf16.mxu0 0
    %498 = vmatpush1.bf16.msra.mxu0 %v366
    %499 = vmatprep.subr.bf16.mxu0 0
    %500 = vmatpush1.bf16.msra.mxu0 %v367
    %501 = vmatprep.subr.bf16.mxu0 0
    %502 = vmatpush1.bf16.msra.mxu0 %v368
    %503 = vmatprep.subr.bf16.mxu0 0
    %504 = vmatpush1.bf16.msra.mxu0 %v369
    %505 = vmatprep.subr.bf16.mxu0 0
    %506 = vmatpush1.bf16.msra.mxu0 %v370
    %507 = vmatprep.subr.bf16.mxu0 0
    %508 = vmatpush1.bf16.msra.mxu0 %v371
    %509 = vmatprep.subr.bf16.mxu0 0
    %510 = vmatpush1.bf16.msra.mxu0 %v372
    %511 = vmatprep.subr.bf16.mxu0 0
    %512 = vmatpush1.bf16.msra.mxu0 %v373
    %513 = vmatprep.subr.bf16.mxu0 0
    %514 = vmatpush1.bf16.msra.mxu0 %v374
    %515 = vmatprep.subr.bf16.mxu0 0
    %516 = vmatpush1.bf16.msra.mxu0 %v375
    %517 = vmatprep.subr.bf16.mxu0 0
    %518 = vmatpush1.bf16.msra.mxu0 %v376
    %519 = vmatprep.mubr.bf16.mxu0 %v139
    %520 = vmatmul.mubr.bf16.gmra.mrb[0].mxu0 %v138
    %v521 = vpop.f32.mrb[0].mxu0
    %v522 = vadd.f32 %v482, %v521
    %v523 = vpop.f32.mrb[0].mxu0
    %v524 = vpop.f32.mrb[0].mxu0
    %v525 = vpop.f32.mrb[0].mxu0
    %526 = vdwg.mxu0
    %527 = vmatprep.subr.bf16.mxu0 0
    %528 = vmatpush1.bf16.msra.mxu0 %v377
    %529 = vmatprep.subr.bf16.mxu0 0
    %530 = vmatpush1.bf16.msra.mxu0 %v378
    %531 = vmatprep.subr.bf16.mxu0 0
    %532 = vmatpush1.bf16.msra.mxu0 %v379
    %533 = vmatprep.subr.bf16.mxu0 0
    %534 = vmatpush1.bf16.msra.mxu0 %v380
    %535 = vmatprep.subr.bf16.mxu0 0
    %536 = vmatpush1.bf16.msra.mxu0 %v381
    %537 = vmatprep.subr.bf16.mxu0 0
    %538 = vmatpush1.bf16.msra.mxu0 %v382
    %539 = vmatprep.subr.bf16.mxu0 0
    %540 = vmatpush1.bf16.msra.mxu0 %v383
    %541 = vmatprep.subr.bf16.mxu0 0
    %542 = vmatpush1.bf16.msra.mxu0 %v384
    %543 = vmatprep.subr.bf16.mxu0 0
    %544 = vmatpush1.bf16.msra.mxu0 %v385
    %545 = vmatprep.subr.bf16.mxu0 0
    %546 = vmatpush1.bf16.msra.mxu0 %v386
    %547 = vmatprep.subr.bf16.mxu0 0
    %548 = vmatpush1.bf16.msra.mxu0 %v387
    %549 = vmatprep.subr.bf16.mxu0 0
    %550 = vmatpush1.bf16.msra.mxu0 %v388
    %551 = vmatprep.subr.bf16.mxu0 0
    %552 = vmatpush1.bf16.msra.mxu0 %v389
    %553 = vmatprep.subr.bf16.mxu0 0
    %554 = vmatpush1.bf16.msra.mxu0 %v390
    %555 = vmatprep.subr.bf16.mxu0 0
    %556 = vmatpush1.bf16.msra.mxu0 %v391
    %557 = vmatprep.subr.bf16.mxu0 0
    %558 = vmatpush1.bf16.msra.mxu0 %v392
    %559 = vmatprep.mubr.bf16.mxu0 %v141
    %560 = vmatmul.mubr.bf16.gmra.mrb[0].mxu0 %v140
    %v561 = vpop.f32.mrb[0].mxu0
    %v562 = vadd.f32 %v522, %v561
    %v563 = vpop.f32.mrb[0].mxu0
    %v564 = vpop.f32.mrb[0].mxu0
    %v565 = vpop.f32.mrb[0].mxu0
    %566 = vdwg.mxu0
    %567 = vmatprep.subr.bf16.mxu0 0
    %568 = vmatpush1.bf16.msra.mxu0 %v393
    %569 = vmatprep.subr.bf16.mxu0 0
    %570 = vmatpush1.bf16.msra.mxu0 0
    %571 = vmatprep.subr.bf16.mxu0 0
    %572 = vmatpush1.bf16.msra.mxu0 0
    %573 = vmatprep.subr.bf16.mxu0 0
    %574 = vmatpush1.bf16.msra.mxu0 0
    %575 = vmatprep.subr.bf16.mxu0 0
    %576 = vmatpush1.bf16.msra.mxu0 0
    %577 = vmatprep.subr.bf16.mxu0 0
    %578 = vmatpush1.bf16.msra.mxu0 0
    %579 = vmatprep.subr.bf16.mxu0 0
    %580 = vmatpush1.bf16.msra.mxu0 0
    %581 = vmatprep.subr.bf16.mxu0 0
    %582 = vmatpush1.bf16.msra.mxu0 0
    %583 = vmatprep.subr.bf16.mxu0 0
    %584 = vmatpush1.bf16.msra.mxu0 0
    %585 = vmatprep.subr.bf16.mxu0 0
    %586 = vmatpush1.bf16.msra.mxu0 0
    %587 = vmatprep.subr.bf16.mxu0 0
    %588 = vmatpush1.bf16.msra.mxu0 0
    %589 = vmatprep.subr.bf16.mxu0 0
    %590 = vmatpush1.bf16.msra.mxu0 0
    %591 = vmatprep.subr.bf16.mxu0 0
    %592 = vmatpush1.bf16.msra.mxu0 0
    %593 = vmatprep.subr.bf16.mxu0 0
    %594 = vmatpush1.bf16.msra.mxu0 0
    %595 = vmatprep.subr.bf16.mxu0 0
    %596 = vmatpush1.bf16.msra.mxu0 0
    %597 = vmatprep.subr.bf16.mxu0 0
    %598 = vmatpush1.bf16.msra.mxu0 0
    %599 = vmatprep.mubr.bf16.mxu0 0
    %600 = vmatmul.mubr.bf16.gmra.mrb[0].mxu0 %v445
    %v601 = vpop.f32.mrb[0].mxu0
    %v602 = vadd.f32 %v562, %v601
    %v603 = vpop.f32.mrb[0].mxu0
    %v604 = vpop.f32.mrb[0].mxu0
    %v605 = vpop.f32.mrb[0].mxu0
    %606 = vdwg.mxu0
    %607 = vst [vmem:[#allocation2] sm:$0xff] %v602
    // Predicated region
    $region14: #{mclr_forward.1} parent=1 // pred_check
      _
    $region15: #{mclr_forward.1} parent=1 // pred_check_branch
      %609 = sbr.rel (0) target = $region17
    $region16: #{mclr_forward.1} parent=1 // pred_region
      %s611 = ssub.s32 128, 128
      %612 = vsyncadd [#allocation3], %s611
      %s614 = sshll.u32 [#allocation2], 4
      %s615 = int_to_ptr.vmem [resolvable:$true] %s614
      %617 = dma.vmem_to_hbm [thread:$0]  %s615, 128, %s3, [#allocation3]
    $region17: #{mclr_forward.1} parent=1 // pred_fallthru
      _
    // Predicated region
    $region18: #{mclr_forward.1} parent=1 // pred_check
      _
    $region19: #{mclr_forward.1} parent=1 // pred_check_branch
      %619 = sbr.rel (0) target = $region21
    $region20: #{mclr_forward.1} parent=1 // pred_region
      %620 = dma.done [#allocation3], 128
    $region21: #{mclr_forward.1} parent=1 // pred_fallthru
      _
    %621 = vsyncpa [#allocation3], 1

</llo_original>
